<compile_context>
chip_gen: v7x
topology: tpu7x:2x2x1
jax: 0.10.0
libtpu: 0.0.40
codegen_flags: <defaults>
</compile_context>

<pallas_src>
import functools

import jax
import jax.numpy as jnp
from jax.experimental import pallas as pl
from jax.experimental.pallas import tpu as pltpu

_LANE = 128
_SUBLANE = 8
_LANE_DENSE_TILE = _LANE * _SUBLANE  # 1024-row granularity for the lane-dense output path


def _round_up(n, m):
    return ((n + m - 1) // m) * m


def _cdiv(a, b):
    return (a + b - 1) // b


def _ranknet_kernel(x_ref, w1_ref, b1_ref, w2_ref, b2_ref, w3t_ref, out_ref, *,
                    precision):
    """One batch tile of sigmoid((mlp(x_i) - mlp(x_j)) @ w3).

    x_ref   : (tb, 2*F)   pair slots are the two lane-contiguous column halves
    w1_ref  : (F, H1)     VMEM-resident across the whole grid (constant index_map)
    b1_ref  : (1, H1)
    w2_ref  : (H1, H2)
    b2_ref  : (1, H2)
    w3t_ref : (1, H2)     final layer transposed; b3 cancels in the difference
    out_ref : (tb//128, 128) lane-dense, or (tb, 1) small-batch fallback
    """
    F = w1_ref.shape[0]
    w1 = w1_ref[...]
    b1 = b1_ref[...]
    w2 = w2_ref[...]
    b2 = b2_ref[...]

    x = x_ref[...]
    x1 = x[:, :F]   # pair slot 0 (lane-aligned view, no VMEM copy)
    x2 = x[:, F:]   # pair slot 1

    def hidden(xi):
        h = jnp.dot(xi, w1, preferred_element_type=jnp.float32,
                    precision=precision) + b1
        h = jnp.maximum(h, 0.0)
        h = jnp.dot(h.astype(w2.dtype), w2, preferred_element_type=jnp.float32,
                    precision=precision) + b2
        return jnp.maximum(h, 0.0)

    # Folded final layer: (h_i - h_j) @ w3 on the VPU (multiply) + XLU (lane reduce);
    # b3 cancels exactly, and the badly-shaped (K=32, N=1) MXU matmul is avoided.
    diff = hidden(x1) - hidden(x2)
    s = jnp.sum(diff * w3t_ref[...], axis=-1, keepdims=True)  # (tb, 1)

    if out_ref.shape[-1] != 1:
        # Lane-dense epilogue: (tb, 1) -> (tb//128, 128) so the sigmoid runs on dense
        # vregs and the store is an unmasked vst (wrapper reshapes back for free).
        s = s.reshape(out_ref.shape)

    # sigmoid(s) = 1 / (1 + exp(-s)); exp and reciprocal both on the EUP slot.
    out_ref[...] = pl.reciprocal(1.0 + jnp.exp(-s), approx=True)


def init_ranknet_params(key, size_list=((128, 64), (64, 32), (32, 1))):
    """Deterministic init mimicking torch.nn.Linear default (U[-1/sqrt(in), 1/sqrt(in)])."""
    params = []
    for (in_size, out_size) in size_list:
        key, kw, kb = jax.random.split(key, 3)
        bound = 1.0 / jnp.sqrt(jnp.float32(in_size))
        w = jax.random.uniform(kw, (in_size, out_size), jnp.float32, -bound, bound)
        # biases kept 2D (1, out) so they broadcast cleanly on TPU vregs
        b = jax.random.uniform(kb, (1, out_size), jnp.float32, -bound, bound)
        params.append((w, b))
    return params


def ranknet_forward(x, params, *, block_rows=4096, min_grid_steps=4, precision=None):
    """RankNet pairwise forward.  x: (B, 2, F).  Returns (P_ij (B, 1) float32, None)."""
    assert x.ndim == 3 and x.shape[1] == 2, "expected input of shape (B, 2, F)"
    B, _, F = x.shape
    (w1, b1), (w2, b2), (w3, _b3) = params  # b3 cancels in the pairwise difference
    assert w1.shape[0] == F
    # The in-kernel pair-slot split x[:, :F] / x[:, F:] assumes lane alignment.
    assert F % _LANE == 0, "feature width must be a multiple of 128"

    x2d = x.reshape(B, 2 * F)            # free row-major reshape, no HBM pass
    w3t = w3.reshape(1, w3.shape[0])     # (H2, 1) -> (1, H2)

    # Narrow-input fast path only when x is already stored bf16 upstream (casting it
    # here would cost a full extra HBM pass).  Weights are tiny -> cast is free.
    if x.dtype == jnp.bfloat16:
        w1 = w1.astype(jnp.bfloat16)
        w2 = w2.astype(jnp.bfloat16)

    max_tile = max(_LANE_DENSE_TILE,
                   (block_rows // _LANE_DENSE_TILE) * _LANE_DENSE_TILE)

    if B >= _LANE_DENSE_TILE:
        # Lane-dense output path: tb is a multiple of 1024 so the (tb//128, 128)
        # output block satisfies the (8, 128) tiling rule; >= min_grid_steps steps
        # when B allows it, so v7x's second TensorCore gets work.
        tb = min(max_tile, _round_up(_cdiv(B, min_grid_steps), _LANE_DENSE_TILE))
        grid_steps = _cdiv(B, tb)        # ragged tail handled in-grid, no jnp.pad
        bp = grid_steps * tb
        lane_dense = True
        out_shape = jax.ShapeDtypeStruct((bp // _LANE, _LANE), jnp.float32)
        out_spec = pl.BlockSpec((tb // _LANE, _LANE), lambda i: (i, 0))
    else:
        # Tiny batch: one full-array block; masked (B, 1) store is irrelevant here.
        tb = B
        grid_steps = 1
        lane_dense = False
        out_shape = jax.ShapeDtypeStruct((B, 1), jnp.float32)
        out_spec = pl.BlockSpec((B, 1), lambda i: (0, 0))

    # Raise scoped VMEM only if the double-buffered input tiles would exceed the most
    # conservative default (v5e: 16 MiB scoped).  Defaults (tb<=4096 f32) never do.
    in_block_bytes = tb * 2 * F * x2d.dtype.itemsize
    cp_kwargs = dict(dimension_semantics=("parallel",))
    if 2 * in_block_bytes > 12 * 1024 * 1024:
        cp_kwargs["vmem_limit_bytes"] = min(2 * in_block_bytes + (8 << 20), 56 << 20)
    compiler_params = pltpu.CompilerParams(**cp_kwargs)

    const2 = lambda i: (0, 0)
    kernel = functools.partial(_ranknet_kernel, precision=precision)

    out = pl.pallas_call(
        kernel,
        out_shape=out_shape,
        grid=(grid_steps,),
        in_specs=[
            pl.BlockSpec((tb, 2 * F), lambda i: (i, 0)),  # one contiguous DMA / step
            pl.BlockSpec(w1.shape, const2),               # weights stay VMEM-resident
            pl.BlockSpec(b1.shape, const2),
            pl.BlockSpec(w2.shape, const2),
            pl.BlockSpec(b2.shape, const2),
            pl.BlockSpec(w3t.shape, const2),
        ],
        out_specs=out_spec,
        compiler_params=compiler_params,
    )(x2d, w1, b1, w2, b2, w3t)

    p_ij = out.reshape(-1, 1)[:B] if lane_dense else out
    return p_ij, None


def _reference_forward(x, params, *, precision=None):
    """Pure-JAX reference (mirrors the PyTorch forward) for a sanity check."""
    (w1, b1), (w2, b2), (w3, b3) = params

    def mlp(h):
        h = jnp.maximum(jnp.dot(h, w1, precision=precision) + b1, 0.0)
        h = jnp.maximum(jnp.dot(h, w2, precision=precision) + b2, 0.0)
        return jnp.dot(h, w3, precision=precision) + b3

    return jax.nn.sigmoid(mlp(x[:, 0, :]) - mlp(x[:, 1, :]))


if __name__ == "__main__":
    key = jax.random.PRNGKey(0)
    k_params, k_small, k_big = jax.random.split(key, 3)

    size_list = ((128, 64), (64, 32), (32, 1))
    params = init_ranknet_params(k_params, size_list)
    F = size_list[0][0]

    # 1) Small-batch fallback path: single grid step, full-array blocks, (B, 1) out.
    B_small = 8
    x_small = jax.random.normal(k_small, (B_small, 2, F), jnp.float32)
    out_small, aux = ranknet_forward(x_small, params)
    out_small = jax.block_until_ready(out_small)
    ref_small = _reference_forward(x_small, params)
    assert out_small.shape == (B_small, 1)
    assert aux is None
    assert jnp.allclose(out_small, ref_small, atol=5e-3, rtol=5e-3)

    # 2) Lane-dense path with a ragged batch: tb=1024, 3 grid steps, no wrapper pad.
    B_big = 2560
    x_big = jax.random.normal(k_big, (B_big, 2, F), jnp.float32)
    out_big, _ = ranknet_forward(x_big, params)
    out_big = jax.block_until_ready(out_big)
    ref_big = _reference_forward(x_big, params)
    assert out_big.shape == (B_big, 1)
    assert jnp.allclose(out_big, ref_big, atol=5e-3, rtol=5e-3)

    # 3) bf16-stored-input fast path (taken only because x is already bf16 here).
    out_bf16, _ = ranknet_forward(x_big.astype(jnp.bfloat16), params)
    out_bf16 = jax.block_until_ready(out_bf16)
    assert out_bf16.shape == (B_big, 1)
    assert jnp.allclose(out_bf16, ref_big, atol=5e-2, rtol=5e-2)

    print("KERNEL_OK")
</pallas_src>

<mosaic_0001>
module attributes {stable_mosaic.version = 11 : i64} {
  func.func @_ranknet_kernel(%arg0: i32, %arg1: memref<8x256xf32, #tpu.memory_space<vmem>>, %arg2: memref<128x64xf32, #tpu.memory_space<vmem>>, %arg3: memref<1x64xf32, #tpu.memory_space<vmem>>, %arg4: memref<64x32xf32, #tpu.memory_space<vmem>>, %arg5: memref<1x32xf32, #tpu.memory_space<vmem>>, %arg6: memref<1x32xf32, #tpu.memory_space<vmem>>, %arg7: memref<8x1xf32, #tpu.memory_space<vmem>>) attributes {dimension_semantics = [#tpu.dimension_semantics<parallel>], iteration_bounds = array<i64: 1>, scalar_prefetch = 0 : i64, scratch_operands = 0 : i64, tpu.core_type = #tpu.core_type<tc>, window_params = [{transform_indices = @transform_0, window_bounds = array<i64: 8, 256>}, {pipeline_mode = #tpu.pipeline_mode<synchronous>, transform_indices = @transform_1, window_bounds = array<i64: 128, 64>}, {pipeline_mode = #tpu.pipeline_mode<synchronous>, transform_indices = @transform_2, window_bounds = array<i64: 1, 64>}, {pipeline_mode = #tpu.pipeline_mode<synchronous>, transform_indices = @transform_3, window_bounds = array<i64: 64, 32>}, {pipeline_mode = #tpu.pipeline_mode<synchronous>, transform_indices = @transform_4, window_bounds = array<i64: 1, 32>}, {pipeline_mode = #tpu.pipeline_mode<synchronous>, transform_indices = @transform_5, window_bounds = array<i64: 1, 32>}, {pipeline_mode = #tpu.pipeline_mode<synchronous>, transform_indices = @transform_6, window_bounds = array<i64: 8, 1>}]} {
    %c0 = arith.constant 0 : index
    %c0_0 = arith.constant 0 : index
    %0 = vector.load %arg2[%c0, %c0_0] : memref<128x64xf32, #tpu.memory_space<vmem>>, vector<128x64xf32>
    %c0_1 = arith.constant 0 : index
    %c0_2 = arith.constant 0 : index
    %1 = vector.load %arg3[%c0_1, %c0_2] : memref<1x64xf32, #tpu.memory_space<vmem>>, vector<1x64xf32>
    %c0_3 = arith.constant 0 : index
    %c0_4 = arith.constant 0 : index
    %2 = vector.load %arg4[%c0_3, %c0_4] : memref<64x32xf32, #tpu.memory_space<vmem>>, vector<64x32xf32>
    %c0_5 = arith.constant 0 : index
    %c0_6 = arith.constant 0 : index
    %3 = vector.load %arg5[%c0_5, %c0_6] : memref<1x32xf32, #tpu.memory_space<vmem>>, vector<1x32xf32>
    %c0_7 = arith.constant 0 : index
    %c0_8 = arith.constant 0 : index
    %4 = vector.load %arg1[%c0_7, %c0_8] : memref<8x256xf32, #tpu.memory_space<vmem>>, vector<8x256xf32>
    %5 = vector.extract_strided_slice %4 {offsets = [0, 0], sizes = [8, 128], strides = [1, 1]} : vector<8x256xf32> to vector<8x128xf32>
    %6 = vector.extract_strided_slice %4 {offsets = [0, 128], sizes = [8, 128], strides = [1, 1]} : vector<8x256xf32> to vector<8x128xf32>
    %cst = arith.constant dense<0.000000e+00> : vector<8x64xf32>
    %7 = tpu.matmul %5, %0, %cst {dimension_numbers = #tpu.dot_dimension_numbers<[1], [0], [0], [1], [0, 0, 1, 1], [], []>} : vector<8x128xf32>, vector<128x64xf32>, vector<8x64xf32> -> vector<8x64xf32>
    %8 = vector.broadcast %1 : vector<1x64xf32> to vector<8x64xf32>
    %9 = arith.addf %7, %8 : vector<8x64xf32>
    %cst_9 = arith.constant 0.000000e+00 : f32
    %10 = vector.broadcast %cst_9 : f32 to vector<8x64xf32>
    %11 = arith.maximumf %9, %10 : vector<8x64xf32>
    %cst_10 = arith.constant dense<0.000000e+00> : vector<8x32xf32>
    %12 = tpu.matmul %11, %2, %cst_10 {dimension_numbers = #tpu.dot_dimension_numbers<[1], [0], [0], [1], [0, 0, 1, 1], [], []>} : vector<8x64xf32>, vector<64x32xf32>, vector<8x32xf32> -> vector<8x32xf32>
    %13 = vector.broadcast %3 : vector<1x32xf32> to vector<8x32xf32>
    %14 = arith.addf %12, %13 : vector<8x32xf32>
    %cst_11 = arith.constant 0.000000e+00 : f32
    %15 = vector.broadcast %cst_11 : f32 to vector<8x32xf32>
    %16 = arith.maximumf %14, %15 : vector<8x32xf32>
    %cst_12 = arith.constant dense<0.000000e+00> : vector<8x64xf32>
    %17 = tpu.matmul %6, %0, %cst_12 {dimension_numbers = #tpu.dot_dimension_numbers<[1], [0], [0], [1], [0, 0, 1, 1], [], []>} : vector<8x128xf32>, vector<128x64xf32>, vector<8x64xf32> -> vector<8x64xf32>
    %18 = vector.broadcast %1 : vector<1x64xf32> to vector<8x64xf32>
    %19 = arith.addf %17, %18 : vector<8x64xf32>
    %cst_13 = arith.constant 0.000000e+00 : f32
    %20 = vector.broadcast %cst_13 : f32 to vector<8x64xf32>
    %21 = arith.maximumf %19, %20 : vector<8x64xf32>
    %cst_14 = arith.constant dense<0.000000e+00> : vector<8x32xf32>
    %22 = tpu.matmul %21, %2, %cst_14 {dimension_numbers = #tpu.dot_dimension_numbers<[1], [0], [0], [1], [0, 0, 1, 1], [], []>} : vector<8x64xf32>, vector<64x32xf32>, vector<8x32xf32> -> vector<8x32xf32>
    %23 = vector.broadcast %3 : vector<1x32xf32> to vector<8x32xf32>
    %24 = arith.addf %22, %23 : vector<8x32xf32>
    %cst_15 = arith.constant 0.000000e+00 : f32
    %25 = vector.broadcast %cst_15 : f32 to vector<8x32xf32>
    %26 = arith.maximumf %24, %25 : vector<8x32xf32>
    %27 = arith.subf %16, %26 : vector<8x32xf32>
    %c0_16 = arith.constant 0 : index
    %c0_17 = arith.constant 0 : index
    %28 = vector.load %arg6[%c0_16, %c0_17] : memref<1x32xf32, #tpu.memory_space<vmem>>, vector<1x32xf32>
    %29 = vector.broadcast %28 : vector<1x32xf32> to vector<8x32xf32>
    %30 = arith.mulf %27, %29 : vector<8x32xf32>
    %cst_18 = arith.constant dense<0.000000e+00> : vector<8xf32>
    %31 = vector.multi_reduction <add>, %30, %cst_18 [1] : vector<8x32xf32> to vector<8xf32>
    %32 = vector.shape_cast %31 : vector<8xf32> to vector<8x1xf32>
    %cst_19 = arith.constant 0.000000e+00 : f32
    %33 = vector.broadcast %cst_19 : f32 to vector<8x1xf32>
    %34 = arith.subf %33, %32 : vector<8x1xf32>
    %35 = math.exp %34 : vector<8x1xf32>
    %cst_20 = arith.constant 1.000000e+00 : f32
    %36 = vector.broadcast %cst_20 : f32 to vector<8x1xf32>
    %37 = arith.addf %36, %35 : vector<8x1xf32>
    %38 = tpu.reciprocal %37 {approx = true} : vector<8x1xf32> -> vector<8x1xf32>
    %c0_21 = arith.constant 0 : index
    %c0_22 = arith.constant 0 : index
    %39 = vector.load %arg7[%c0_21, %c0_22] : memref<8x1xf32, #tpu.memory_space<vmem>>, vector<8x1xf32>
    tpu.vector_store %arg7[%c0_21, %c0_22], %38 {strides = array<i32>} : memref<8x1xf32, #tpu.memory_space<vmem>>, vector<8x1xf32>,
    return
  }
  func.func @transform_0(%arg0: i32) -> (i32, i32) {
    %c0_i32 = arith.constant 0 : i32
    %c0_i32_0 = arith.constant 0 : i32
    return %arg0, %c0_i32 : i32, i32
  }
  func.func @transform_1(%arg0: i32) -> (i32, i32) {
    %c0_i32 = arith.constant 0 : i32
    %c0_i32_0 = arith.constant 0 : i32
    %c0_i32_1 = arith.constant 0 : i32
    return %c0_i32, %c0_i32_0 : i32, i32
  }
  func.func @transform_2(%arg0: i32) -> (i32, i32) {
    %c0_i32 = arith.constant 0 : i32
    %c0_i32_0 = arith.constant 0 : i32
    %c0_i32_1 = arith.constant 0 : i32
    return %c0_i32, %c0_i32_0 : i32, i32
  }
  func.func @transform_3(%arg0: i32) -> (i32, i32) {
    %c0_i32 = arith.constant 0 : i32
    %c0_i32_0 = arith.constant 0 : i32
    %c0_i32_1 = arith.constant 0 : i32
    return %c0_i32, %c0_i32_0 : i32, i32
  }
  func.func @transform_4(%arg0: i32) -> (i32, i32) {
    %c0_i32 = arith.constant 0 : i32
    %c0_i32_0 = arith.constant 0 : i32
    %c0_i32_1 = arith.constant 0 : i32
    return %c0_i32, %c0_i32_0 : i32, i32
  }
  func.func @transform_5(%arg0: i32) -> (i32, i32) {
    %c0_i32 = arith.constant 0 : i32
    %c0_i32_0 = arith.constant 0 : i32
    %c0_i32_1 = arith.constant 0 : i32
    return %c0_i32, %c0_i32_0 : i32, i32
  }
  func.func @transform_6(%arg0: i32) -> (i32, i32) {
    %c0_i32 = arith.constant 0 : i32
    %c0_i32_0 = arith.constant 0 : i32
    %c0_i32_1 = arith.constant 0 : i32
    return %c0_i32, %c0_i32_0 : i32, i32
  }
}

</mosaic_0001>

<llo_original>
// kernel: tpu_custom_call.1
$region0: #{tpu_custom_call.1}
  #allocation0 [shape = 'u32[]', space=smem, size = 0x4, offset = 0x4, fixed_abs, tag = 'smem constant byte address 0x4 - core index']
  #allocation1 [shape = 'u32[144,128]{1,0:T(1,128)}', space=vmem, size = 0x12000, scoped, tag = 'internal scratch']
  %s0 = inlined_call_operand.vmem [shape: f32[8,256], index: 0, kind: input, shape index: {}]
  %s1 = inlined_call_operand.vmem [shape: f32[128,64], index: 1, kind: input, shape index: {}]
  %s2 = inlined_call_operand.vmem [shape: f32[1,64], index: 2, kind: input, shape index: {}]
  %s3 = inlined_call_operand.vmem [shape: f32[64,32], index: 3, kind: input, shape index: {}]
  %s4 = inlined_call_operand.vmem [shape: f32[1,32], index: 4, kind: input, shape index: {}]
  %s5 = inlined_call_operand.vmem [shape: f32[1,32], index: 5, kind: input, shape index: {}]
  %s6 = inlined_call_operand.vmem [shape: f32[8,1], index: 6, kind: output, shape index: {}]
  %s7 = sld [smem:[#allocation0]]
  $region34: #{tpu_custom_call.1} parent=0
    _
  %s9 = ssub.s32 1, %s7
  %s10 = scalar_select 0, %s9, %s7
  // Predicated region
  $region2: #{tpu_custom_call.1} parent=0 // pred_check
    _
  $region3: #{tpu_custom_call.1} parent=0 // pred_check_branch
    %12 = sbr.rel (0) target = $region5
  $region4: #{tpu_custom_call.1} parent=0 // pred_region
    _
  $region5: #{tpu_custom_call.1} parent=0 // pred_fallthru
    _
  // Predicated region
  $region6: #{tpu_custom_call.1} parent=0 // pred_check
    _
  $region7: #{tpu_custom_call.1} parent=0 // pred_check_branch
    %14 = sbr.rel (0) target = $region9
  $region8: #{tpu_custom_call.1} parent=0 // pred_region
    _
  $region9: #{tpu_custom_call.1} parent=0 // pred_fallthru
    _
  // Predicated region
  $region10: #{tpu_custom_call.1} parent=0 // pred_check
    _
  $region11: #{tpu_custom_call.1} parent=0 // pred_check_branch
    %16 = sbr.rel (0) target = $region13
  $region12: #{tpu_custom_call.1} parent=0 // pred_region
    _
  $region13: #{tpu_custom_call.1} parent=0 // pred_fallthru
    _
  // Predicated region
  $region14: #{tpu_custom_call.1} parent=0 // pred_check
    _
  $region15: #{tpu_custom_call.1} parent=0 // pred_check_branch
    %18 = sbr.rel (0) target = $region17
  $region16: #{tpu_custom_call.1} parent=0 // pred_region
    _
  $region17: #{tpu_custom_call.1} parent=0 // pred_fallthru
    _
  // Predicated region
  $region18: #{tpu_custom_call.1} parent=0 // pred_check
    _
  $region19: #{tpu_custom_call.1} parent=0 // pred_check_branch
    %20 = sbr.rel (0) target = $region21
  $region20: #{tpu_custom_call.1} parent=0 // pred_region
    _
  $region21: #{tpu_custom_call.1} parent=0 // pred_fallthru
    _
  // Predicated region
  $region22: #{tpu_custom_call.1} parent=0 // pred_check
    _
  $region23: #{tpu_custom_call.1} parent=0 // pred_check_branch
    %22 = sbr.rel (0) target = $region25
  $region24: #{tpu_custom_call.1} parent=0 // pred_region
    _
  $region25: #{tpu_custom_call.1} parent=0 // pred_fallthru
    _
  %v23 = vld [vmem:[%s1] sm:$0xff]
  %v24 = vld [vmem:[%s1 + $0x8] sm:$0xff]
  %v25 = vld [vmem:[%s1 + $0x10] sm:$0xff]
  %v26 = vld [vmem:[%s1 + $0x18] sm:$0xff]
  %v27 = vld [vmem:[%s1 + $0x20] sm:$0xff]
  %v28 = vld [vmem:[%s1 + $0x28] sm:$0xff]
  %v29 = vld [vmem:[%s1 + $0x30] sm:$0xff]
  %v30 = vld [vmem:[%s1 + $0x38] sm:$0xff]
  %v31 = vld [vmem:[%s1 + $0x40] sm:$0xff]
  %v32 = vld [vmem:[%s1 + $0x48] sm:$0xff]
  %v33 = vld [vmem:[%s1 + $0x50] sm:$0xff]
  %v34 = vld [vmem:[%s1 + $0x58] sm:$0xff]
  %v35 = vld [vmem:[%s1 + $0x60] sm:$0xff]
  %v36 = vld [vmem:[%s1 + $0x68] sm:$0xff]
  %v37 = vld [vmem:[%s1 + $0x70] sm:$0xff]
  %v38 = vld [vmem:[%s1 + $0x78] sm:$0xff]
  %v39 = vld [vmem:[%s2] sm:$0x1]
  %v40 = vld [vmem:[%s3] sm:$0xff]
  %v41 = vld [vmem:[%s3 + $0x8] sm:$0xff]
  %v42 = vld [vmem:[%s3 + $0x10] sm:$0xff]
  %v43 = vld [vmem:[%s3 + $0x18] sm:$0xff]
  %v44 = vld [vmem:[%s3 + $0x20] sm:$0xff]
  %v45 = vld [vmem:[%s3 + $0x28] sm:$0xff]
  %v46 = vld [vmem:[%s3 + $0x30] sm:$0xff]
  %v47 = vld [vmem:[%s3 + $0x38] sm:$0xff]
  %v48 = vld [vmem:[%s4] sm:$0x1]
  %v49 = vld [vmem:[%s0] sm:$0xff]
  %v50 = vld [vmem:[%s0 + $0x8] sm:$0xff]
  %v52 = vlaneseq
  %v53 = vshrl.u32 %v52, 7
  %v54 = vsub.s32 0, %v53
  %v55 = vrot.slane %v39, %v54
  %57 = vmatprep.subr.mxu0 0.0
  %58 = vmatpush1.msra.mxu0 %v23
  %59 = vmatprep.subr.mxu0 0.0
  %60 = vmatpush1.msra.mxu0 %v24
  %61 = vmatprep.subr.mxu0 0.0
  %62 = vmatpush1.msra.mxu0 %v25
  %63 = vmatprep.subr.mxu0 0.0
  %64 = vmatpush1.msra.mxu0 %v26
  %65 = vmatprep.subr.mxu0 0.0
  %66 = vmatpush1.msra.mxu0 %v27
  %67 = vmatprep.subr.mxu0 0.0
  %68 = vmatpush1.msra.mxu0 %v28
  %69 = vmatprep.subr.mxu0 0.0
  %70 = vmatpush1.msra.mxu0 %v29
  %71 = vmatprep.subr.mxu0 0.0
  %72 = vmatpush1.msra.mxu0 %v30
  %73 = vmatprep.subr.mxu0 0.0
  %74 = vmatpush1.msra.mxu0 %v31
  %75 = vmatprep.subr.mxu0 0.0
  %76 = vmatpush1.msra.mxu0 %v32
  %77 = vmatprep.subr.mxu0 0.0
  %78 = vmatpush1.msra.mxu0 %v33
  %79 = vmatprep.subr.mxu0 0.0
  %80 = vmatpush1.msra.mxu0 %v34
  %81 = vmatprep.subr.mxu0 0.0
  %82 = vmatpush1.msra.mxu0 %v35
  %83 = vmatprep.subr.mxu0 0.0
  %84 = vmatpush1.msra.mxu0 %v36
  %85 = vmatprep.subr.mxu0 0.0
  %86 = vmatpush1.msra.mxu0 %v37
  %87 = vmatprep.subr.mxu0 0.0
  %88 = vmatpush1.msra.mxu0 %v38
  %89 = vmatprep.subr.mxu0 0.0
  %90 = vmatpush1.msra.mxu0 0.0
  %91 = vmatprep.subr.mxu0 0.0
  %92 = vmatpush1.msra.mxu0 0.0
  %93 = vmatprep.subr.mxu0 0.0
  %94 = vmatpush1.msra.mxu0 0.0
  %95 = vmatprep.subr.mxu0 0.0
  %96 = vmatpush1.msra.mxu0 0.0
  %97 = vmatprep.subr.mxu0 0.0
  %98 = vmatpush1.msra.mxu0 0.0
  %99 = vmatprep.subr.mxu0 0.0
  %100 = vmatpush1.msra.mxu0 0.0
  %101 = vmatprep.subr.mxu0 0.0
  %102 = vmatpush1.msra.mxu0 0.0
  %103 = vmatprep.subr.mxu0 0.0
  %104 = vmatpush1.msra.mxu0 0.0
  %105 = vmatprep.subr.mxu0 0.0
  %106 = vmatpush1.msra.mxu0 0.0
  %107 = vmatprep.subr.mxu0 0.0
  %108 = vmatpush1.msra.mxu0 0.0
  %109 = vmatprep.subr.mxu0 0.0
  %110 = vmatpush1.msra.mxu0 0.0
  %111 = vmatprep.subr.mxu0 0.0
  %112 = vmatpush1.msra.mxu0 0.0
  %113 = vmatprep.subr.mxu0 0.0
  %114 = vmatpush1.msra.mxu0 0.0
  %115 = vmatprep.subr.mxu0 0.0
  %116 = vmatpush1.msra.mxu0 0.0
  %117 = vmatprep.subr.mxu0 0.0
  %118 = vmatpush1.msra.mxu0 0.0
  %119 = vmatprep.subr.mxu0 0.0
  %120 = vmatpush1.msra.mxu0 0.0
  %121 = vmatprep.mubr.f32.mxu0 0.0
  %122 = vmatmul.mubr.f32.gmra.mrb[0].mxu0 %v49
  %v123 = vpop.f32.mrb[0].mxu0
  %v124 = vadd.f32 %v55, %v123
  %v125 = vpop.f32.mrb[0].mxu0
  %126 = vdwg.mxu0
  %v127 = vmax.f32 %v124, 0.0
  %v129 = vlaneseq
  %v130 = vshrl.u32 %v129, 7
  %v131 = vsub.s32 0, %v130
  %v132 = vrot.slane %v48, %v131
  %vm134 = vcmask 523264
  %v136 = vsel %vm134, %v127, 0
  %138 = vmatprep.subr.mxu0 0.0
  %139 = vmatpush1.msra.mxu0 %v40
  %140 = vmatprep.subr.mxu0 0.0
  %141 = vmatpush1.msra.mxu0 %v41
  %142 = vmatprep.subr.mxu0 0.0
  %143 = vmatpush1.msra.mxu0 %v42
  %144 = vmatprep.subr.mxu0 0.0
  %145 = vmatpush1.msra.mxu0 %v43
  %146 = vmatprep.subr.mxu0 0.0
  %147 = vmatpush1.msra.mxu0 %v44
  %148 = vmatprep.subr.mxu0 0.0
  %149 = vmatpush1.msra.mxu0 %v45
  %150 = vmatprep.subr.mxu0 0.0
  %151 = vmatpush1.msra.mxu0 %v46
  %152 = vmatprep.subr.mxu0 0.0
  %153 = vmatpush1.msra.mxu0 %v47
  %154 = vmatprep.subr.mxu0 0.0
  %155 = vmatpush1.msra.mxu0 0.0
  %156 = vmatprep.subr.mxu0 0.0
  %157 = vmatpush1.msra.mxu0 0.0
  %158 = vmatprep.subr.mxu0 0.0
  %159 = vmatpush1.msra.mxu0 0.0
  %160 = vmatprep.subr.mxu0 0.0
  %161 = vmatpush1.msra.mxu0 0.0
  %162 = vmatprep.subr.mxu0 0.0
  %163 = vmatpush1.msra.mxu0 0.0
  %164 = vmatprep.subr.mxu0 0.0
  %165 = vmatpush1.msra.mxu0 0.0
  %166 = vmatprep.subr.mxu0 0.0
  %167 = vmatpush1.msra.mxu0 0.0
  %168 = vmatprep.subr.mxu0 0.0
  %169 = vmatpush1.msra.mxu0 0.0
  %170 = vmatprep.subr.mxu0 0.0
  %171 = vmatpush1.msra.mxu0 0.0
  %172 = vmatprep.subr.mxu0 0.0
  %173 = vmatpush1.msra.mxu0 0.0
  %174 = vmatprep.subr.mxu0 0.0
  %175 = vmatpush1.msra.mxu0 0.0
  %176 = vmatprep.subr.mxu0 0.0
  %177 = vmatpush1.msra.mxu0 0.0
  %178 = vmatprep.subr.mxu0 0.0
  %179 = vmatpush1.msra.mxu0 0.0
  %180 = vmatprep.subr.mxu0 0.0
  %181 = vmatpush1.msra.mxu0 0.0
  %182 = vmatprep.subr.mxu0 0.0
  %183 = vmatpush1.msra.mxu0 0.0
  %184 = vmatprep.subr.mxu0 0.0
  %185 = vmatpush1.msra.mxu0 0.0
  %186 = vmatprep.subr.mxu0 0.0
  %187 = vmatpush1.msra.mxu0 0.0
  %188 = vmatprep.subr.mxu0 0.0
  %189 = vmatpush1.msra.mxu0 0.0
  %190 = vmatprep.subr.mxu0 0.0
  %191 = vmatpush1.msra.mxu0 0.0
  %192 = vmatprep.subr.mxu0 0.0
  %193 = vmatpush1.msra.mxu0 0.0
  %194 = vmatprep.subr.mxu0 0.0
  %195 = vmatpush1.msra.mxu0 0.0
  %196 = vmatprep.subr.mxu0 0.0
  %197 = vmatpush1.msra.mxu0 0.0
  %198 = vmatprep.subr.mxu0 0.0
  %199 = vmatpush1.msra.mxu0 0.0
  %200 = vmatprep.subr.mxu0 0.0
  %201 = vmatpush1.msra.mxu0 0.0
  %202 = vmatprep.mubr.f32.mxu0 0.0
  %203 = vmatmul.mubr.f32.gmra.mrb[0].mxu0 %v136
  %v204 = vpop.f32.mrb[0].mxu0
  %v205 = vadd.f32 %v132, %v204
  %v206 = vpop.f32.mrb[0].mxu0
  %207 = vdwg.mxu0
  %v208 = vmax.f32 %v205, 0.0
  %209 = vmatprep.subr.mxu0 0.0
  %210 = vmatpush1.msra.mxu0 %v23
  %211 = vmatprep.subr.mxu0 0.0
  %212 = vmatpush1.msra.mxu0 %v24
  %213 = vmatprep.subr.mxu0 0.0
  %214 = vmatpush1.msra.mxu0 %v25
  %215 = vmatprep.subr.mxu0 0.0
  %216 = vmatpush1.msra.mxu0 %v26
  %217 = vmatprep.subr.mxu0 0.0
  %218 = vmatpush1.msra.mxu0 %v27
  %219 = vmatprep.subr.mxu0 0.0
  %220 = vmatpush1.msra.mxu0 %v28
  %221 = vmatprep.subr.mxu0 0.0
  %222 = vmatpush1.msra.mxu0 %v29
  %223 = vmatprep.subr.mxu0 0.0
  %224 = vmatpush1.msra.mxu0 %v30
  %225 = vmatprep.subr.mxu0 0.0
  %226 = vmatpush1.msra.mxu0 %v31
  %227 = vmatprep.subr.mxu0 0.0
  %228 = vmatpush1.msra.mxu0 %v32
  %229 = vmatprep.subr.mxu0 0.0
  %230 = vmatpush1.msra.mxu0 %v33
  %231 = vmatprep.subr.mxu0 0.0
  %232 = vmatpush1.msra.mxu0 %v34
  %233 = vmatprep.subr.mxu0 0.0
  %234 = vmatpush1.msra.mxu0 %v35
  %235 = vmatprep.subr.mxu0 0.0
  %236 = vmatpush1.msra.mxu0 %v36
  %237 = vmatprep.subr.mxu0 0.0
  %238 = vmatpush1.msra.mxu0 %v37
  %239 = vmatprep.subr.mxu0 0.0
  %240 = vmatpush1.msra.mxu0 %v38
  %241 = vmatprep.subr.mxu0 0.0
  %242 = vmatpush1.msra.mxu0 0.0
  %243 = vmatprep.subr.mxu0 0.0
  %244 = vmatpush1.msra.mxu0 0.0
  %245 = vmatprep.subr.mxu0 0.0
  %246 = vmatpush1.msra.mxu0 0.0
  %247 = vmatprep.subr.mxu0 0.0
  %248 = vmatpush1.msra.mxu0 0.0
  %249 = vmatprep.subr.mxu0 0.0
  %250 = vmatpush1.msra.mxu0 0.0
  %251 = vmatprep.subr.mxu0 0.0
  %252 = vmatpush1.msra.mxu0 0.0
  %253 = vmatprep.subr.mxu0 0.0
  %254 = vmatpush1.msra.mxu0 0.0
  %255 = vmatprep.subr.mxu0 0.0
  %256 = vmatpush1.msra.mxu0 0.0
  %257 = vmatprep.subr.mxu0 0.0
  %258 = vmatpush1.msra.mxu0 0.0
  %259 = vmatprep.subr.mxu0 0.0
  %260 = vmatpush1.msra.mxu0 0.0
  %261 = vmatprep.subr.mxu0 0.0
  %262 = vmatpush1.msra.mxu0 0.0
  %263 = vmatprep.subr.mxu0 0.0
  %264 = vmatpush1.msra.mxu0 0.0
  %265 = vmatprep.subr.mxu0 0.0
  %266 = vmatpush1.msra.mxu0 0.0
  %267 = vmatprep.subr.mxu0 0.0
  %268 = vmatpush1.msra.mxu0 0.0
  %269 = vmatprep.subr.mxu0 0.0
  %270 = vmatpush1.msra.mxu0 0.0
  %271 = vmatprep.subr.mxu0 0.0
  %272 = vmatpush1.msra.mxu0 0.0
  %273 = vmatprep.mubr.f32.mxu0 0.0
  %274 = vmatmul.mubr.f32.gmra.mrb[0].mxu0 %v50
  %v275 = vpop.f32.mrb[0].mxu0
  %v276 = vadd.f32 %v55, %v275
  %v277 = vpop.f32.mrb[0].mxu0
  %278 = vdwg.mxu0
  %v279 = vmax.f32 %v276, 0.0
  %v281 = vsel %vm134, %v279, 0
  %283 = vmatprep.subr.mxu0 0.0
  %284 = vmatpush1.msra.mxu0 %v40
  %285 = vmatprep.subr.mxu0 0.0
  %286 = vmatpush1.msra.mxu0 %v41
  %287 = vmatprep.subr.mxu0 0.0
  %288 = vmatpush1.msra.mxu0 %v42
  %289 = vmatprep.subr.mxu0 0.0
  %290 = vmatpush1.msra.mxu0 %v43
  %291 = vmatprep.subr.mxu0 0.0
  %292 = vmatpush1.msra.mxu0 %v44
  %293 = vmatprep.subr.mxu0 0.0
  %294 = vmatpush1.msra.mxu0 %v45
  %295 = vmatprep.subr.mxu0 0.0
  %296 = vmatpush1.msra.mxu0 %v46
  %297 = vmatprep.subr.mxu0 0.0
  %298 = vmatpush1.msra.mxu0 %v47
  %299 = vmatprep.subr.mxu0 0.0
  %300 = vmatpush1.msra.mxu0 0.0
  %301 = vmatprep.subr.mxu0 0.0
  %302 = vmatpush1.msra.mxu0 0.0
  %303 = vmatprep.subr.mxu0 0.0
  %304 = vmatpush1.msra.mxu0 0.0
  %305 = vmatprep.subr.mxu0 0.0
  %306 = vmatpush1.msra.mxu0 0.0
  %307 = vmatprep.subr.mxu0 0.0
  %308 = vmatpush1.msra.mxu0 0.0
  %309 = vmatprep.subr.mxu0 0.0
  %310 = vmatpush1.msra.mxu0 0.0
  %311 = vmatprep.subr.mxu0 0.0
  %312 = vmatpush1.msra.mxu0 0.0
  %313 = vmatprep.subr.mxu0 0.0
  %314 = vmatpush1.msra.mxu0 0.0
  %315 = vmatprep.subr.mxu0 0.0
  %316 = vmatpush1.msra.mxu0 0.0
  %317 = vmatprep.subr.mxu0 0.0
  %318 = vmatpush1.msra.mxu0 0.0
  %319 = vmatprep.subr.mxu0 0.0
  %320 = vmatpush1.msra.mxu0 0.0
  %321 = vmatprep.subr.mxu0 0.0
  %322 = vmatpush1.msra.mxu0 0.0
  %323 = vmatprep.subr.mxu0 0.0
  %324 = vmatpush1.msra.mxu0 0.0
  %325 = vmatprep.subr.mxu0 0.0
  %326 = vmatpush1.msra.mxu0 0.0
  %327 = vmatprep.subr.mxu0 0.0
  %328 = vmatpush1.msra.mxu0 0.0
  %329 = vmatprep.subr.mxu0 0.0
  %330 = vmatpush1.msra.mxu0 0.0
  %331 = vmatprep.subr.mxu0 0.0
  %332 = vmatpush1.msra.mxu0 0.0
  %333 = vmatprep.subr.mxu0 0.0
  %334 = vmatpush1.msra.mxu0 0.0
  %335 = vmatprep.subr.mxu0 0.0
  %336 = vmatpush1.msra.mxu0 0.0
  %337 = vmatprep.subr.mxu0 0.0
  %338 = vmatpush1.msra.mxu0 0.0
  %339 = vmatprep.subr.mxu0 0.0
  %340 = vmatpush1.msra.mxu0 0.0
  %341 = vmatprep.subr.mxu0 0.0
  %342 = vmatpush1.msra.mxu0 0.0
  %343 = vmatprep.subr.mxu0 0.0
  %344 = vmatpush1.msra.mxu0 0.0
  %345 = vmatprep.subr.mxu0 0.0
  %346 = vmatpush1.msra.mxu0 0.0
  %347 = vmatprep.mubr.f32.mxu0 0.0
  %348 = vmatmul.mubr.f32.gmra.mrb[0].mxu0 %v281
  %v349 = vpop.f32.mrb[0].mxu0
  %v350 = vadd.f32 %v132, %v349
  %v351 = vpop.f32.mrb[0].mxu0
  %352 = vdwg.mxu0
  %v353 = vmax.f32 %v350, 0.0
  %v354 = vsub.f32 %v208, %v353
  %v355 = vld [vmem:[%s5] sm:$0x1]
  %v357 = vlaneseq
  %v358 = vshrl.u32 %v357, 7
  %v359 = vsub.s32 0, %v358
  %v360 = vrot.slane %v355, %v359
  %v362 = vmul.f32 %v354, %v360
  %vm363 = vcmask 261120
  %v364 = vsel %vm363, %v362, 0.0
  %365 = vadd.xlane.f32.xlu0 %v364
  %v366 = vpop.xlane.xlu0 %365
  %v367 = vsub.f32 0.0, %v366
  %v368 = vmul.f32 %v367, 1.442695
  %v369 = vpow.pop %v368
  %v370 = vadd.f32 %v369, 1.0
  %v371 = vrcp.pop %v370
  %vm372 = vcmask 7168
  %373 = vst.msk [vmem:[%s6] sm:$0xff] %vm372, %v371
  // Predicated region
  $region26: #{tpu_custom_call.1} parent=0 // pred_check
    _
  $region27: #{tpu_custom_call.1} parent=0 // pred_check_branch
    %375 = sbr.rel (0) target = $region29
  $region28: #{tpu_custom_call.1} parent=0 // pred_region
    _
  $region29: #{tpu_custom_call.1} parent=0 // pred_fallthru
    _
  // Predicated region
  $region30: #{tpu_custom_call.1} parent=0 // pred_check
    _
  $region31: #{tpu_custom_call.1} parent=0 // pred_check_branch
    %377 = sbr.rel (0) target = $region33
  $region32: #{tpu_custom_call.1} parent=0 // pred_region
    _
  $region33: #{tpu_custom_call.1} parent=0 // pred_fallthru
    _

</llo_original>
